<compile_context>
chip_gen: v5e
topology: v5e:2x2
jax: 0.10.0
libtpu: 0.0.40
codegen_flags: <defaults>
</compile_context>

<pallas_src>
import numpy as np
import jax
import jax.numpy as jnp
from jax.experimental import pallas as pl
from jax.experimental.pallas import tpu as pltpu

HP = 128  # padded hidden width (native 128-lane tile)


# ----------------------------- Pallas kernel --------------------------------
def weather_rnn_kernel(x_ref, w_ih_ref, w_hhT_ref, bias_ref,
                       w_fc_ref, b_fc_ref, out_ref):
    """Full RNN unroll + FC head, single invocation, everything in VMEM.

    x_ref:     (B, T)    f32   inputs (input_size == 1, squeezed)
    w_ih_ref:  (1, HP)   f32   W_ih.T, zero-padded to HP lanes
    w_hhT_ref: (HP, HP)  bf16  W_hh.T, zero-padded rows/cols
    bias_ref:  (1, HP)   f32   b_ih + b_hh, zero-padded
    w_fc_ref:  (1, HP)   f32   fc.weight row, zero-padded
    b_fc_ref:  (1, 1)    f32   fc.bias
    out_ref:   (B, 1)    f32
    """
    T = x_ref.shape[1]

    w_ih = w_ih_ref[...]                      # (1, HP)
    bias = bias_ref[...]                      # (1, HP)
    w_hhT = w_hhT_ref[...]                    # (HP, HP) bf16, loaded once

    # Step 0: h0 == 0, so the recurrent matmul contributes exactly zero.
    h = jnp.tanh(x_ref[:, 0:1] * w_ih + bias)                 # (B, HP) f32

    for t in range(1, T):                                      # static unroll
        # Input projection for step t: independent of h -> off the critical
        # path, hidden under the MXU latency of the previous step's matmul.
        pre_t = x_ref[:, t:t + 1] * w_ih + bias                # (B, HP)
        # Single-pass bf16 MXU matmul, f32 accumulation.
        hh = jnp.dot(h.astype(jnp.bfloat16), w_hhT,
                     preferred_element_type=jnp.float32)       # (B, HP)
        h = jnp.tanh(pre_t + hh)

    # FC head: (B,HP) x (HP,1) as VPU multiply + lane reduction (padded lanes
    # of w_fc are zero, so the 128-lane sum equals the 64-lane sum).
    out_ref[...] = (jnp.sum(h * w_fc_ref[...], axis=-1, keepdims=True)
                    + b_fc_ref[...])                           # (B, 1)


# ------------------------ one-time parameter prep ----------------------------
def prepare_params(params, hp=HP):
    """Layout/padding/cast glue done ONCE at init, not per forward call."""
    H = params["w_hh"].shape[0]
    w_ih = jnp.zeros((1, hp), jnp.float32).at[0, :H].set(params["w_ih"][:, 0])
    bias = jnp.zeros((1, hp), jnp.float32).at[0, :H].set(
        params["b_ih"] + params["b_hh"])
    w_hhT = (jnp.zeros((hp, hp), jnp.float32)
             .at[:H, :H].set(params["w_hh"].T)
             .astype(jnp.bfloat16))
    w_fc = jnp.zeros((1, hp), jnp.float32).at[0, :H].set(params["w_fc"][0])
    b_fc = params["b_fc"].reshape(1, 1).astype(jnp.float32)
    return {"w_ih": w_ih, "w_hhT": w_hhT, "bias": bias,
            "w_fc": w_fc, "b_fc": b_fc}


# ------------------------------ JAX wrapper ----------------------------------
def _forward(x, prepped):
    """x: (B, T, 1) float32 (batch_first, like PyTorch).  Returns (B, 1)."""
    B, T, I = x.shape
    assert I == 1
    x2d = x[:, :, 0]                                  # (B, T): free squeeze

    vmem = pl.BlockSpec(memory_space=pltpu.MemorySpace.VMEM)
    return pl.pallas_call(
        weather_rnn_kernel,
        out_shape=jax.ShapeDtypeStruct((B, 1), jnp.float32),
        in_specs=[vmem] * 6,
        out_specs=vmem,
    )(x2d, prepped["w_ih"], prepped["w_hhT"], prepped["bias"],
      prepped["w_fc"], prepped["b_fc"])


weather_rnn_forward = jax.jit(_forward)


# --------------------------- pure-JAX reference -------------------------------
def weather_rnn_reference(x, params):
    B, T, _ = x.shape
    H = params["w_hh"].shape[0]
    h = jnp.zeros((B, H), dtype=jnp.float32)
    for t in range(T):
        x_t = x[:, t, :]                               # (B, 1)
        h = jnp.tanh(x_t @ params["w_ih"].T + params["b_ih"]
                     + h @ params["w_hh"].T + params["b_hh"])
    return h @ params["w_fc"].T + params["b_fc"]


# ----------------------------------- main -------------------------------------
if __name__ == "__main__":
    # Shapes consistent with the module: Config.INPUT_SIZE=1,
    # Config.HIDDEN_SIZE=64, Config.OUTPUT_SIZE=1, Config.TIME_STEPS=20.
    B, T, I, H, O = 8, 20, 1, 64, 1

    key = jax.random.PRNGKey(0)
    ks = jax.random.split(key, 7)
    bound = 1.0 / np.sqrt(H)   # PyTorch default uniform(-1/sqrt(H), 1/sqrt(H))

    params = {
        "w_ih": jax.random.uniform(ks[0], (H, I), jnp.float32, -bound, bound),
        "w_hh": jax.random.uniform(ks[1], (H, H), jnp.float32, -bound, bound),
        "b_ih": jax.random.uniform(ks[2], (H,), jnp.float32, -bound, bound),
        "b_hh": jax.random.uniform(ks[3], (H,), jnp.float32, -bound, bound),
        "w_fc": jax.random.uniform(ks[4], (O, H), jnp.float32, -bound, bound),
        "b_fc": jax.random.uniform(ks[5], (O,), jnp.float32, -bound, bound),
    }
    x = jax.random.normal(ks[6], (B, T, I), jnp.float32)

    prepped = prepare_params(params)                  # one-time layout glue
    out = weather_rnn_forward(x, prepped)
    out = jax.block_until_ready(out)

    ref = weather_rnn_reference(x, params)
    # Tolerance relaxed vs the f32 reference: the kernel intentionally uses a
    # single-pass bf16 MXU matmul (f32 accumulation) for the recurrence.
    np.testing.assert_allclose(np.asarray(out), np.asarray(ref),
                               rtol=3e-2, atol=3e-2)

    print("KERNEL_OK")
</pallas_src>

<mosaic_0001>
module attributes {stable_mosaic.version = 11 : i64} {
  func.func @weather_rnn_kernel(%arg0: memref<8x20xf32, #tpu.memory_space<vmem>>, %arg1: memref<1x128xf32, #tpu.memory_space<vmem>>, %arg2: memref<128x128xbf16, #tpu.memory_space<vmem>>, %arg3: memref<1x128xf32, #tpu.memory_space<vmem>>, %arg4: memref<1x128xf32, #tpu.memory_space<vmem>>, %arg5: memref<1x1xf32, #tpu.memory_space<vmem>>, %arg6: memref<8x1xf32, #tpu.memory_space<vmem>>) attributes {dimension_semantics = [], scalar_prefetch = 0 : i64, scratch_operands = 0 : i64, tpu.core_type = #tpu.core_type<tc>} {
    %c0 = arith.constant 0 : index
    %c0_0 = arith.constant 0 : index
    %0 = vector.load %arg1[%c0, %c0_0] : memref<1x128xf32, #tpu.memory_space<vmem>>, vector<1x128xf32>
    %c0_1 = arith.constant 0 : index
    %c0_2 = arith.constant 0 : index
    %1 = vector.load %arg3[%c0_1, %c0_2] : memref<1x128xf32, #tpu.memory_space<vmem>>, vector<1x128xf32>
    %c0_3 = arith.constant 0 : index
    %c0_4 = arith.constant 0 : index
    %2 = vector.load %arg2[%c0_3, %c0_4] : memref<128x128xbf16, #tpu.memory_space<vmem>>, vector<128x128xbf16>
    %c0_5 = arith.constant 0 : index
    %c0_6 = arith.constant 0 : index
    %3 = vector.load %arg0[%c0_5, %c0_6] : memref<8x20xf32, #tpu.memory_space<vmem>>, vector<8x1xf32>
    %4 = vector.broadcast %3 : vector<8x1xf32> to vector<8x128xf32>
    %5 = vector.broadcast %0 : vector<1x128xf32> to vector<8x128xf32>
    %6 = arith.mulf %4, %5 : vector<8x128xf32>
    %7 = vector.broadcast %1 : vector<1x128xf32> to vector<8x128xf32>
    %8 = arith.addf %6, %7 : vector<8x128xf32>
    %9 = math.tanh %8 : vector<8x128xf32>
    %c0_7 = arith.constant 0 : index
    %c1 = arith.constant 1 : index
    %10 = vector.load %arg0[%c0_7, %c1] : memref<8x20xf32, #tpu.memory_space<vmem>>, vector<8x1xf32>
    %11 = vector.broadcast %10 : vector<8x1xf32> to vector<8x128xf32>
    %12 = vector.broadcast %0 : vector<1x128xf32> to vector<8x128xf32>
    %13 = arith.mulf %11, %12 : vector<8x128xf32>
    %14 = vector.broadcast %1 : vector<1x128xf32> to vector<8x128xf32>
    %15 = arith.addf %13, %14 : vector<8x128xf32>
    %16 = arith.truncf %9 : vector<8x128xf32> to vector<8x128xbf16>
    %cst = arith.constant dense<0.000000e+00> : vector<8x128xf32>
    %17 = tpu.matmul %16, %2, %cst {dimension_numbers = #tpu.dot_dimension_numbers<[1], [0], [0], [1], [0, 0, 1, 1], [], []>} : vector<8x128xbf16>, vector<128x128xbf16>, vector<8x128xf32> -> vector<8x128xf32>
    %18 = arith.addf %15, %17 : vector<8x128xf32>
    %19 = math.tanh %18 : vector<8x128xf32>
    %c0_8 = arith.constant 0 : index
    %c2 = arith.constant 2 : index
    %20 = vector.load %arg0[%c0_8, %c2] : memref<8x20xf32, #tpu.memory_space<vmem>>, vector<8x1xf32>
    %21 = vector.broadcast %20 : vector<8x1xf32> to vector<8x128xf32>
    %22 = vector.broadcast %0 : vector<1x128xf32> to vector<8x128xf32>
    %23 = arith.mulf %21, %22 : vector<8x128xf32>
    %24 = vector.broadcast %1 : vector<1x128xf32> to vector<8x128xf32>
    %25 = arith.addf %23, %24 : vector<8x128xf32>
    %26 = arith.truncf %19 : vector<8x128xf32> to vector<8x128xbf16>
    %cst_9 = arith.constant dense<0.000000e+00> : vector<8x128xf32>
    %27 = tpu.matmul %26, %2, %cst_9 {dimension_numbers = #tpu.dot_dimension_numbers<[1], [0], [0], [1], [0, 0, 1, 1], [], []>} : vector<8x128xbf16>, vector<128x128xbf16>, vector<8x128xf32> -> vector<8x128xf32>
    %28 = arith.addf %25, %27 : vector<8x128xf32>
    %29 = math.tanh %28 : vector<8x128xf32>
    %c0_10 = arith.constant 0 : index
    %c3 = arith.constant 3 : index
    %30 = vector.load %arg0[%c0_10, %c3] : memref<8x20xf32, #tpu.memory_space<vmem>>, vector<8x1xf32>
    %31 = vector.broadcast %30 : vector<8x1xf32> to vector<8x128xf32>
    %32 = vector.broadcast %0 : vector<1x128xf32> to vector<8x128xf32>
    %33 = arith.mulf %31, %32 : vector<8x128xf32>
    %34 = vector.broadcast %1 : vector<1x128xf32> to vector<8x128xf32>
    %35 = arith.addf %33, %34 : vector<8x128xf32>
    %36 = arith.truncf %29 : vector<8x128xf32> to vector<8x128xbf16>
    %cst_11 = arith.constant dense<0.000000e+00> : vector<8x128xf32>
    %37 = tpu.matmul %36, %2, %cst_11 {dimension_numbers = #tpu.dot_dimension_numbers<[1], [0], [0], [1], [0, 0, 1, 1], [], []>} : vector<8x128xbf16>, vector<128x128xbf16>, vector<8x128xf32> -> vector<8x128xf32>
    %38 = arith.addf %35, %37 : vector<8x128xf32>
    %39 = math.tanh %38 : vector<8x128xf32>
    %c0_12 = arith.constant 0 : index
    %c4 = arith.constant 4 : index
    %40 = vector.load %arg0[%c0_12, %c4] : memref<8x20xf32, #tpu.memory_space<vmem>>, vector<8x1xf32>
    %41 = vector.broadcast %40 : vector<8x1xf32> to vector<8x128xf32>
    %42 = vector.broadcast %0 : vector<1x128xf32> to vector<8x128xf32>
    %43 = arith.mulf %41, %42 : vector<8x128xf32>
    %44 = vector.broadcast %1 : vector<1x128xf32> to vector<8x128xf32>
    %45 = arith.addf %43, %44 : vector<8x128xf32>
    %46 = arith.truncf %39 : vector<8x128xf32> to vector<8x128xbf16>
    %cst_13 = arith.constant dense<0.000000e+00> : vector<8x128xf32>
    %47 = tpu.matmul %46, %2, %cst_13 {dimension_numbers = #tpu.dot_dimension_numbers<[1], [0], [0], [1], [0, 0, 1, 1], [], []>} : vector<8x128xbf16>, vector<128x128xbf16>, vector<8x128xf32> -> vector<8x128xf32>
    %48 = arith.addf %45, %47 : vector<8x128xf32>
    %49 = math.tanh %48 : vector<8x128xf32>
    %c0_14 = arith.constant 0 : index
    %c5 = arith.constant 5 : index
    %50 = vector.load %arg0[%c0_14, %c5] : memref<8x20xf32, #tpu.memory_space<vmem>>, vector<8x1xf32>
    %51 = vector.broadcast %50 : vector<8x1xf32> to vector<8x128xf32>
    %52 = vector.broadcast %0 : vector<1x128xf32> to vector<8x128xf32>
    %53 = arith.mulf %51, %52 : vector<8x128xf32>
    %54 = vector.broadcast %1 : vector<1x128xf32> to vector<8x128xf32>
    %55 = arith.addf %53, %54 : vector<8x128xf32>
    %56 = arith.truncf %49 : vector<8x128xf32> to vector<8x128xbf16>
    %cst_15 = arith.constant dense<0.000000e+00> : vector<8x128xf32>
    %57 = tpu.matmul %56, %2, %cst_15 {dimension_numbers = #tpu.dot_dimension_numbers<[1], [0], [0], [1], [0, 0, 1, 1], [], []>} : vector<8x128xbf16>, vector<128x128xbf16>, vector<8x128xf32> -> vector<8x128xf32>
    %58 = arith.addf %55, %57 : vector<8x128xf32>
    %59 = math.tanh %58 : vector<8x128xf32>
    %c0_16 = arith.constant 0 : index
    %c6 = arith.constant 6 : index
    %60 = vector.load %arg0[%c0_16, %c6] : memref<8x20xf32, #tpu.memory_space<vmem>>, vector<8x1xf32>
    %61 = vector.broadcast %60 : vector<8x1xf32> to vector<8x128xf32>
    %62 = vector.broadcast %0 : vector<1x128xf32> to vector<8x128xf32>
    %63 = arith.mulf %61, %62 : vector<8x128xf32>
    %64 = vector.broadcast %1 : vector<1x128xf32> to vector<8x128xf32>
    %65 = arith.addf %63, %64 : vector<8x128xf32>
    %66 = arith.truncf %59 : vector<8x128xf32> to vector<8x128xbf16>
    %cst_17 = arith.constant dense<0.000000e+00> : vector<8x128xf32>
    %67 = tpu.matmul %66, %2, %cst_17 {dimension_numbers = #tpu.dot_dimension_numbers<[1], [0], [0], [1], [0, 0, 1, 1], [], []>} : vector<8x128xbf16>, vector<128x128xbf16>, vector<8x128xf32> -> vector<8x128xf32>
    %68 = arith.addf %65, %67 : vector<8x128xf32>
    %69 = math.tanh %68 : vector<8x128xf32>
    %c0_18 = arith.constant 0 : index
    %c7 = arith.constant 7 : index
    %70 = vector.load %arg0[%c0_18, %c7] : memref<8x20xf32, #tpu.memory_space<vmem>>, vector<8x1xf32>
    %71 = vector.broadcast %70 : vector<8x1xf32> to vector<8x128xf32>
    %72 = vector.broadcast %0 : vector<1x128xf32> to vector<8x128xf32>
    %73 = arith.mulf %71, %72 : vector<8x128xf32>
    %74 = vector.broadcast %1 : vector<1x128xf32> to vector<8x128xf32>
    %75 = arith.addf %73, %74 : vector<8x128xf32>
    %76 = arith.truncf %69 : vector<8x128xf32> to vector<8x128xbf16>
    %cst_19 = arith.constant dense<0.000000e+00> : vector<8x128xf32>
    %77 = tpu.matmul %76, %2, %cst_19 {dimension_numbers = #tpu.dot_dimension_numbers<[1], [0], [0], [1], [0, 0, 1, 1], [], []>} : vector<8x128xbf16>, vector<128x128xbf16>, vector<8x128xf32> -> vector<8x128xf32>
    %78 = arith.addf %75, %77 : vector<8x128xf32>
    %79 = math.tanh %78 : vector<8x128xf32>
    %c0_20 = arith.constant 0 : index
    %c8 = arith.constant 8 : index
    %80 = vector.load %arg0[%c0_20, %c8] : memref<8x20xf32, #tpu.memory_space<vmem>>, vector<8x1xf32>
    %81 = vector.broadcast %80 : vector<8x1xf32> to vector<8x128xf32>
    %82 = vector.broadcast %0 : vector<1x128xf32> to vector<8x128xf32>
    %83 = arith.mulf %81, %82 : vector<8x128xf32>
    %84 = vector.broadcast %1 : vector<1x128xf32> to vector<8x128xf32>
    %85 = arith.addf %83, %84 : vector<8x128xf32>
    %86 = arith.truncf %79 : vector<8x128xf32> to vector<8x128xbf16>
    %cst_21 = arith.constant dense<0.000000e+00> : vector<8x128xf32>
    %87 = tpu.matmul %86, %2, %cst_21 {dimension_numbers = #tpu.dot_dimension_numbers<[1], [0], [0], [1], [0, 0, 1, 1], [], []>} : vector<8x128xbf16>, vector<128x128xbf16>, vector<8x128xf32> -> vector<8x128xf32>
    %88 = arith.addf %85, %87 : vector<8x128xf32>
    %89 = math.tanh %88 : vector<8x128xf32>
    %c0_22 = arith.constant 0 : index
    %c9 = arith.constant 9 : index
    %90 = vector.load %arg0[%c0_22, %c9] : memref<8x20xf32, #tpu.memory_space<vmem>>, vector<8x1xf32>
    %91 = vector.broadcast %90 : vector<8x1xf32> to vector<8x128xf32>
    %92 = vector.broadcast %0 : vector<1x128xf32> to vector<8x128xf32>
    %93 = arith.mulf %91, %92 : vector<8x128xf32>
    %94 = vector.broadcast %1 : vector<1x128xf32> to vector<8x128xf32>
    %95 = arith.addf %93, %94 : vector<8x128xf32>
    %96 = arith.truncf %89 : vector<8x128xf32> to vector<8x128xbf16>
    %cst_23 = arith.constant dense<0.000000e+00> : vector<8x128xf32>
    %97 = tpu.matmul %96, %2, %cst_23 {dimension_numbers = #tpu.dot_dimension_numbers<[1], [0], [0], [1], [0, 0, 1, 1], [], []>} : vector<8x128xbf16>, vector<128x128xbf16>, vector<8x128xf32> -> vector<8x128xf32>
    %98 = arith.addf %95, %97 : vector<8x128xf32>
    %99 = math.tanh %98 : vector<8x128xf32>
    %c0_24 = arith.constant 0 : index
    %c10 = arith.constant 10 : index
    %100 = vector.load %arg0[%c0_24, %c10] : memref<8x20xf32, #tpu.memory_space<vmem>>, vector<8x1xf32>
    %101 = vector.broadcast %100 : vector<8x1xf32> to vector<8x128xf32>
    %102 = vector.broadcast %0 : vector<1x128xf32> to vector<8x128xf32>
    %103 = arith.mulf %101, %102 : vector<8x128xf32>
    %104 = vector.broadcast %1 : vector<1x128xf32> to vector<8x128xf32>
    %105 = arith.addf %103, %104 : vector<8x128xf32>
    %106 = arith.truncf %99 : vector<8x128xf32> to vector<8x128xbf16>
    %cst_25 = arith.constant dense<0.000000e+00> : vector<8x128xf32>
    %107 = tpu.matmul %106, %2, %cst_25 {dimension_numbers = #tpu.dot_dimension_numbers<[1], [0], [0], [1], [0, 0, 1, 1], [], []>} : vector<8x128xbf16>, vector<128x128xbf16>, vector<8x128xf32> -> vector<8x128xf32>
    %108 = arith.addf %105, %107 : vector<8x128xf32>
    %109 = math.tanh %108 : vector<8x128xf32>
    %c0_26 = arith.constant 0 : index
    %c11 = arith.constant 11 : index
    %110 = vector.load %arg0[%c0_26, %c11] : memref<8x20xf32, #tpu.memory_space<vmem>>, vector<8x1xf32>
    %111 = vector.broadcast %110 : vector<8x1xf32> to vector<8x128xf32>
    %112 = vector.broadcast %0 : vector<1x128xf32> to vector<8x128xf32>
    %113 = arith.mulf %111, %112 : vector<8x128xf32>
    %114 = vector.broadcast %1 : vector<1x128xf32> to vector<8x128xf32>
    %115 = arith.addf %113, %114 : vector<8x128xf32>
    %116 = arith.truncf %109 : vector<8x128xf32> to vector<8x128xbf16>
    %cst_27 = arith.constant dense<0.000000e+00> : vector<8x128xf32>
    %117 = tpu.matmul %116, %2, %cst_27 {dimension_numbers = #tpu.dot_dimension_numbers<[1], [0], [0], [1], [0, 0, 1, 1], [], []>} : vector<8x128xbf16>, vector<128x128xbf16>, vector<8x128xf32> -> vector<8x128xf32>
    %118 = arith.addf %115, %117 : vector<8x128xf32>
    %119 = math.tanh %118 : vector<8x128xf32>
    %c0_28 = arith.constant 0 : index
    %c12 = arith.constant 12 : index
    %120 = vector.load %arg0[%c0_28, %c12] : memref<8x20xf32, #tpu.memory_space<vmem>>, vector<8x1xf32>
    %121 = vector.broadcast %120 : vector<8x1xf32> to vector<8x128xf32>
    %122 = vector.broadcast %0 : vector<1x128xf32> to vector<8x128xf32>
    %123 = arith.mulf %121, %122 : vector<8x128xf32>
    %124 = vector.broadcast %1 : vector<1x128xf32> to vector<8x128xf32>
    %125 = arith.addf %123, %124 : vector<8x128xf32>
    %126 = arith.truncf %119 : vector<8x128xf32> to vector<8x128xbf16>
    %cst_29 = arith.constant dense<0.000000e+00> : vector<8x128xf32>
    %127 = tpu.matmul %126, %2, %cst_29 {dimension_numbers = #tpu.dot_dimension_numbers<[1], [0], [0], [1], [0, 0, 1, 1], [], []>} : vector<8x128xbf16>, vector<128x128xbf16>, vector<8x128xf32> -> vector<8x128xf32>
    %128 = arith.addf %125, %127 : vector<8x128xf32>
    %129 = math.tanh %128 : vector<8x128xf32>
    %c0_30 = arith.constant 0 : index
    %c13 = arith.constant 13 : index
    %130 = vector.load %arg0[%c0_30, %c13] : memref<8x20xf32, #tpu.memory_space<vmem>>, vector<8x1xf32>
    %131 = vector.broadcast %130 : vector<8x1xf32> to vector<8x128xf32>
    %132 = vector.broadcast %0 : vector<1x128xf32> to vector<8x128xf32>
    %133 = arith.mulf %131, %132 : vector<8x128xf32>
    %134 = vector.broadcast %1 : vector<1x128xf32> to vector<8x128xf32>
    %135 = arith.addf %133, %134 : vector<8x128xf32>
    %136 = arith.truncf %129 : vector<8x128xf32> to vector<8x128xbf16>
    %cst_31 = arith.constant dense<0.000000e+00> : vector<8x128xf32>
    %137 = tpu.matmul %136, %2, %cst_31 {dimension_numbers = #tpu.dot_dimension_numbers<[1], [0], [0], [1], [0, 0, 1, 1], [], []>} : vector<8x128xbf16>, vector<128x128xbf16>, vector<8x128xf32> -> vector<8x128xf32>
    %138 = arith.addf %135, %137 : vector<8x128xf32>
    %139 = math.tanh %138 : vector<8x128xf32>
    %c0_32 = arith.constant 0 : index
    %c14 = arith.constant 14 : index
    %140 = vector.load %arg0[%c0_32, %c14] : memref<8x20xf32, #tpu.memory_space<vmem>>, vector<8x1xf32>
    %141 = vector.broadcast %140 : vector<8x1xf32> to vector<8x128xf32>
    %142 = vector.broadcast %0 : vector<1x128xf32> to vector<8x128xf32>
    %143 = arith.mulf %141, %142 : vector<8x128xf32>
    %144 = vector.broadcast %1 : vector<1x128xf32> to vector<8x128xf32>
    %145 = arith.addf %143, %144 : vector<8x128xf32>
    %146 = arith.truncf %139 : vector<8x128xf32> to vector<8x128xbf16>
    %cst_33 = arith.constant dense<0.000000e+00> : vector<8x128xf32>
    %147 = tpu.matmul %146, %2, %cst_33 {dimension_numbers = #tpu.dot_dimension_numbers<[1], [0], [0], [1], [0, 0, 1, 1], [], []>} : vector<8x128xbf16>, vector<128x128xbf16>, vector<8x128xf32> -> vector<8x128xf32>
    %148 = arith.addf %145, %147 : vector<8x128xf32>
    %149 = math.tanh %148 : vector<8x128xf32>
    %c0_34 = arith.constant 0 : index
    %c15 = arith.constant 15 : index
    %150 = vector.load %arg0[%c0_34, %c15] : memref<8x20xf32, #tpu.memory_space<vmem>>, vector<8x1xf32>
    %151 = vector.broadcast %150 : vector<8x1xf32> to vector<8x128xf32>
    %152 = vector.broadcast %0 : vector<1x128xf32> to vector<8x128xf32>
    %153 = arith.mulf %151, %152 : vector<8x128xf32>
    %154 = vector.broadcast %1 : vector<1x128xf32> to vector<8x128xf32>
    %155 = arith.addf %153, %154 : vector<8x128xf32>
    %156 = arith.truncf %149 : vector<8x128xf32> to vector<8x128xbf16>
    %cst_35 = arith.constant dense<0.000000e+00> : vector<8x128xf32>
    %157 = tpu.matmul %156, %2, %cst_35 {dimension_numbers = #tpu.dot_dimension_numbers<[1], [0], [0], [1], [0, 0, 1, 1], [], []>} : vector<8x128xbf16>, vector<128x128xbf16>, vector<8x128xf32> -> vector<8x128xf32>
    %158 = arith.addf %155, %157 : vector<8x128xf32>
    %159 = math.tanh %158 : vector<8x128xf32>
    %c0_36 = arith.constant 0 : index
    %c16 = arith.constant 16 : index
    %160 = vector.load %arg0[%c0_36, %c16] : memref<8x20xf32, #tpu.memory_space<vmem>>, vector<8x1xf32>
    %161 = vector.broadcast %160 : vector<8x1xf32> to vector<8x128xf32>
    %162 = vector.broadcast %0 : vector<1x128xf32> to vector<8x128xf32>
    %163 = arith.mulf %161, %162 : vector<8x128xf32>
    %164 = vector.broadcast %1 : vector<1x128xf32> to vector<8x128xf32>
    %165 = arith.addf %163, %164 : vector<8x128xf32>
    %166 = arith.truncf %159 : vector<8x128xf32> to vector<8x128xbf16>
    %cst_37 = arith.constant dense<0.000000e+00> : vector<8x128xf32>
    %167 = tpu.matmul %166, %2, %cst_37 {dimension_numbers = #tpu.dot_dimension_numbers<[1], [0], [0], [1], [0, 0, 1, 1], [], []>} : vector<8x128xbf16>, vector<128x128xbf16>, vector<8x128xf32> -> vector<8x128xf32>
    %168 = arith.addf %165, %167 : vector<8x128xf32>
    %169 = math.tanh %168 : vector<8x128xf32>
    %c0_38 = arith.constant 0 : index
    %c17 = arith.constant 17 : index
    %170 = vector.load %arg0[%c0_38, %c17] : memref<8x20xf32, #tpu.memory_space<vmem>>, vector<8x1xf32>
    %171 = vector.broadcast %170 : vector<8x1xf32> to vector<8x128xf32>
    %172 = vector.broadcast %0 : vector<1x128xf32> to vector<8x128xf32>
    %173 = arith.mulf %171, %172 : vector<8x128xf32>
    %174 = vector.broadcast %1 : vector<1x128xf32> to vector<8x128xf32>
    %175 = arith.addf %173, %174 : vector<8x128xf32>
    %176 = arith.truncf %169 : vector<8x128xf32> to vector<8x128xbf16>
    %cst_39 = arith.constant dense<0.000000e+00> : vector<8x128xf32>
    %177 = tpu.matmul %176, %2, %cst_39 {dimension_numbers = #tpu.dot_dimension_numbers<[1], [0], [0], [1], [0, 0, 1, 1], [], []>} : vector<8x128xbf16>, vector<128x128xbf16>, vector<8x128xf32> -> vector<8x128xf32>
    %178 = arith.addf %175, %177 : vector<8x128xf32>
    %179 = math.tanh %178 : vector<8x128xf32>
    %c0_40 = arith.constant 0 : index
    %c18 = arith.constant 18 : index
    %180 = vector.load %arg0[%c0_40, %c18] : memref<8x20xf32, #tpu.memory_space<vmem>>, vector<8x1xf32>
    %181 = vector.broadcast %180 : vector<8x1xf32> to vector<8x128xf32>
    %182 = vector.broadcast %0 : vector<1x128xf32> to vector<8x128xf32>
    %183 = arith.mulf %181, %182 : vector<8x128xf32>
    %184 = vector.broadcast %1 : vector<1x128xf32> to vector<8x128xf32>
    %185 = arith.addf %183, %184 : vector<8x128xf32>
    %186 = arith.truncf %179 : vector<8x128xf32> to vector<8x128xbf16>
    %cst_41 = arith.constant dense<0.000000e+00> : vector<8x128xf32>
    %187 = tpu.matmul %186, %2, %cst_41 {dimension_numbers = #tpu.dot_dimension_numbers<[1], [0], [0], [1], [0, 0, 1, 1], [], []>} : vector<8x128xbf16>, vector<128x128xbf16>, vector<8x128xf32> -> vector<8x128xf32>
    %188 = arith.addf %185, %187 : vector<8x128xf32>
    %189 = math.tanh %188 : vector<8x128xf32>
    %c0_42 = arith.constant 0 : index
    %c19 = arith.constant 19 : index
    %190 = vector.load %arg0[%c0_42, %c19] : memref<8x20xf32, #tpu.memory_space<vmem>>, vector<8x1xf32>
    %191 = vector.broadcast %190 : vector<8x1xf32> to vector<8x128xf32>
    %192 = vector.broadcast %0 : vector<1x128xf32> to vector<8x128xf32>
    %193 = arith.mulf %191, %192 : vector<8x128xf32>
    %194 = vector.broadcast %1 : vector<1x128xf32> to vector<8x128xf32>
    %195 = arith.addf %193, %194 : vector<8x128xf32>
    %196 = arith.truncf %189 : vector<8x128xf32> to vector<8x128xbf16>
    %cst_43 = arith.constant dense<0.000000e+00> : vector<8x128xf32>
    %197 = tpu.matmul %196, %2, %cst_43 {dimension_numbers = #tpu.dot_dimension_numbers<[1], [0], [0], [1], [0, 0, 1, 1], [], []>} : vector<8x128xbf16>, vector<128x128xbf16>, vector<8x128xf32> -> vector<8x128xf32>
    %198 = arith.addf %195, %197 : vector<8x128xf32>
    %199 = math.tanh %198 : vector<8x128xf32>
    %c0_44 = arith.constant 0 : index
    %c0_45 = arith.constant 0 : index
    %200 = vector.load %arg4[%c0_44, %c0_45] : memref<1x128xf32, #tpu.memory_space<vmem>>, vector<1x128xf32>
    %201 = vector.broadcast %200 : vector<1x128xf32> to vector<8x128xf32>
    %202 = arith.mulf %199, %201 : vector<8x128xf32>
    %cst_46 = arith.constant dense<0.000000e+00> : vector<8xf32>
    %203 = vector.multi_reduction <add>, %202, %cst_46 [1] : vector<8x128xf32> to vector<8xf32>
    %204 = vector.shape_cast %203 : vector<8xf32> to vector<8x1xf32>
    %c0_47 = arith.constant 0 : index
    %c0_48 = arith.constant 0 : index
    %205 = vector.load %arg5[%c0_47, %c0_48] : memref<1x1xf32, #tpu.memory_space<vmem>>, vector<1x1xf32>
    %206 = vector.broadcast %205 : vector<1x1xf32> to vector<8x1xf32>
    %207 = arith.addf %204, %206 : vector<8x1xf32>
    %c0_49 = arith.constant 0 : index
    %c0_50 = arith.constant 0 : index
    %208 = vector.load %arg6[%c0_49, %c0_50] : memref<8x1xf32, #tpu.memory_space<vmem>>, vector<8x1xf32>
    tpu.vector_store %arg6[%c0_49, %c0_50], %207 {strides = array<i32>} : memref<8x1xf32, #tpu.memory_space<vmem>>, vector<8x1xf32>,
    return
  }
}

</mosaic_0001>

<llo_original>
// kernel: _forward.1
$region0: #{_forward.1}
  #allocation0 [shape = 'u32[]', space=smem, size = 0x4, offset = 0x4, fixed_abs, tag = 'smem constant byte address 0x4 - core index']
  #allocation1 [shape = 'u32[72,128]{1,0:T(1,128)}', space=vmem, size = 0x9000, scoped, tag = 'internal scratch']
  #allocation2 [shape = 'f32[1,1]{1,0:T(1,128)S(1)}', space=vmem, size = 0x200, scoped, tag = 'scoped memory for _forward.1']
  %s0 = inlined_call_operand.hbm [shape: f32[8,20], index: 0, kind: input, shape index: {}]
  %s1 = inlined_call_operand.vmem [shape: f32[1,128], index: 1, kind: input, shape index: {}]
  %s2 = inlined_call_operand.hbm [shape: bf16[128,128], index: 2, kind: input, shape index: {}]
  %s3 = inlined_call_operand.vmem [shape: f32[1,128], index: 3, kind: input, shape index: {}]
  %s4 = inlined_call_operand.vmem [shape: f32[1,128], index: 4, kind: input, shape index: {}]
  %s5 = inlined_call_operand.<no memory space> [shape: f32[1,1], index: 5, kind: input, shape index: {}]
  %s6 = inlined_call_operand.vmem [shape: f32[8,1], index: 6, kind: output, shape index: {}]
  %s7 = sld [smem:[#allocation0]]
  $region42: #{_forward.1} parent=0
    _
  %s9 = ssub.s32 1, %s7
  %s10 = scalar_select 0, %s9, %s7
  %v11 = vstv %s5
  %12 = vst [vmem:[#allocation2] sm:$0x1] %v11
  $region1: #{_forward.1} parent=0
    #allocation3 [shape = 'u8[4096]{0}', space=vmem, size = 0x1000, scoped, tag = 'input window, operand 0, single buffered']
    #allocation4 [shape = 's32[1]{0}', space=sflag, size = 0x4, scoped, tag = 'scoped memory for _forward.1']
    #allocation5 [shape = 'u8[32768]{0}', space=vmem, size = 0x8000, scoped, tag = 'input window, operand 2, single buffered']
    #allocation6 [shape = 's32[1]{0}', space=sflag, size = 0x4, scoped, tag = 'scoped memory for _forward.1']
    %13 = vsyncpa [#allocation4], 0
    %14 = vsyncpa [#allocation6], 0
    // Predicated region
    $region2: #{_forward.1} parent=1 // pred_check
      _
    $region3: #{_forward.1} parent=1 // pred_check_branch
      %16 = sbr.rel (0) target = $region5
    $region4: #{_forward.1} parent=1 // pred_region
      %18 = vsyncadd [#allocation4], 0
      %s20 = sshll.u32 %s0, 4
      %s21 = int_to_ptr.hbm [resolvable:$true] %s20
      %s22 = sshll.u32 [#allocation3], 4
      %s23 = int_to_ptr.vmem [resolvable:$true] %s22
      %25 = dma.hbm_to_vmem [thread:$0]  %s21, 128, %s23, [#allocation4]
    $region5: #{_forward.1} parent=1 // pred_fallthru
      _
    // Predicated region
    $region6: #{_forward.1} parent=1 // pred_check
      _
    $region7: #{_forward.1} parent=1 // pred_check_branch
      %27 = sbr.rel (0) target = $region9
    $region8: #{_forward.1} parent=1 // pred_region
      _
    $region9: #{_forward.1} parent=1 // pred_fallthru
      _
    // Predicated region
    $region10: #{_forward.1} parent=1 // pred_check
      _
    $region11: #{_forward.1} parent=1 // pred_check_branch
      %29 = sbr.rel (0) target = $region13
    $region12: #{_forward.1} parent=1 // pred_region
      %31 = vsyncadd [#allocation6], 0
      %s32 = sshll.u32 %s2, 4
      %s33 = int_to_ptr.hbm [resolvable:$true] %s32
      %s34 = sshll.u32 [#allocation5], 4
      %s35 = int_to_ptr.vmem [resolvable:$true] %s34
      %40 = dma.hbm_to_vmem [thread:$0]  %s33, 1024, %s35, [#allocation6], 64, 64, 4
    $region13: #{_forward.1} parent=1 // pred_fallthru
      _
    // Predicated region
    $region14: #{_forward.1} parent=1 // pred_check
      _
    $region15: #{_forward.1} parent=1 // pred_check_branch
      %42 = sbr.rel (0) target = $region17
    $region16: #{_forward.1} parent=1 // pred_region
      _
    $region17: #{_forward.1} parent=1 // pred_fallthru
      _
    // Predicated region
    $region18: #{_forward.1} parent=1 // pred_check
      _
    $region19: #{_forward.1} parent=1 // pred_check_branch
      %44 = sbr.rel (0) target = $region21
    $region20: #{_forward.1} parent=1 // pred_region
      _
    $region21: #{_forward.1} parent=1 // pred_fallthru
      _
    // Predicated region
    $region22: #{_forward.1} parent=1 // pred_check
      _
    $region23: #{_forward.1} parent=1 // pred_check_branch
      %46 = sbr.rel (0) target = $region25
    $region24: #{_forward.1} parent=1 // pred_region
      _
    $region25: #{_forward.1} parent=1 // pred_fallthru
      _
    // Predicated region
    $region26: #{_forward.1} parent=1 // pred_check
      _
    $region27: #{_forward.1} parent=1 // pred_check_branch
      %48 = sbr.rel (0) target = $region29
    $region28: #{_forward.1} parent=1 // pred_region
      %50 = dma.done [#allocation4], 128
    $region29: #{_forward.1} parent=1 // pred_fallthru
      _
    // Predicated region
    $region30: #{_forward.1} parent=1 // pred_check
      _
    $region31: #{_forward.1} parent=1 // pred_check_branch
      %52 = sbr.rel (0) target = $region33
    $region32: #{_forward.1} parent=1 // pred_region
      %54 = dma.done [#allocation6], 1024
    $region33: #{_forward.1} parent=1 // pred_fallthru
      _
    %v55 = vld [vmem:[%s1] sm:$0x1]
    %v56 = vld [vmem:[%s3] sm:$0x1]
    %v57 = vld [vmem:[#allocation5] sm:$0xf]
    %v58 = vld [vmem:[#allocation5 + $0x4] sm:$0xf]
    %v59 = vld [vmem:[#allocation5 + $0x8] sm:$0xf]
    %v60 = vld [vmem:[#allocation5 + $0xc] sm:$0xf]
    %v61 = vld [vmem:[#allocation5 + $0x10] sm:$0xf]
    %v62 = vld [vmem:[#allocation5 + $0x14] sm:$0xf]
    %v63 = vld [vmem:[#allocation5 + $0x18] sm:$0xf]
    %v64 = vld [vmem:[#allocation5 + $0x1c] sm:$0xf]
    %v65 = vld [vmem:[#allocation5 + $0x20] sm:$0xf]
    %v66 = vld [vmem:[#allocation5 + $0x24] sm:$0xf]
    %v67 = vld [vmem:[#allocation5 + $0x28] sm:$0xf]
    %v68 = vld [vmem:[#allocation5 + $0x2c] sm:$0xf]
    %v69 = vld [vmem:[#allocation5 + $0x30] sm:$0xf]
    %v70 = vld [vmem:[#allocation5 + $0x34] sm:$0xf]
    %v71 = vld [vmem:[#allocation5 + $0x38] sm:$0xf]
    %v72 = vld [vmem:[#allocation5 + $0x3c] sm:$0xf]
    %v73 = vld [vmem:[#allocation3] sm:$0xff]
    %75 = vset.pattern.permute.xlu0 0
    %76 = vperm.xlu0 %75, %v73
    %v77 = vpop.permute.xlu0 %76
    %v80 = vperm.slane %v55, 0
    %v82 = vmul.f32 %v77, %v80
    %v84 = vperm.slane %v56, 0
    %v86 = vadd.f32 %v82, %v84
    %v87 = vtanh.pop %v86
    %88 = vset.pattern.permute.xlu0 1
    %89 = vperm.xlu0 %88, %v73
    %v90 = vpop.permute.xlu0 %89
    %v92 = vmul.f32 %v90, %v80
    %v93 = vadd.f32 %v92, %v84
    %v94 = vpack.c.bf16 %v87, %v87
    %v111 = vunpack.c.l.b16 %v57
    %v112 = vunpack.c.l.b16 %v58
    %v113 = vunpack.c.l.b16 %v59
    %v114 = vunpack.c.l.b16 %v60
    %v115 = vunpack.c.l.b16 %v61
    %v116 = vunpack.c.l.b16 %v62
    %v117 = vunpack.c.l.b16 %v63
    %v118 = vunpack.c.l.b16 %v64
    %v119 = vunpack.c.l.b16 %v65
    %v120 = vunpack.c.l.b16 %v66
    %v121 = vunpack.c.l.b16 %v67
    %v122 = vunpack.c.l.b16 %v68
    %v123 = vunpack.c.l.b16 %v69
    %v124 = vunpack.c.l.b16 %v70
    %v125 = vunpack.c.l.b16 %v71
    %v126 = vunpack.c.l.b16 %v72
    %v127 = vpack.c.b16 %v112, %v111
    %v128 = vpack.c.b16 %v114, %v113
    %v129 = vpack.c.b16 %v116, %v115
    %v130 = vpack.c.b16 %v118, %v117
    %v131 = vpack.c.b16 %v120, %v119
    %v132 = vpack.c.b16 %v122, %v121
    %v133 = vpack.c.b16 %v124, %v123
    %v134 = vpack.c.b16 %v126, %v125
    %143 = vmatpush.bf16.msra.mxu0 %v134
    %144 = vmatpush.bf16.msra.mxu0 %v133
    %145 = vmatpush.bf16.msra.mxu0 %v132
    %146 = vmatpush.bf16.msra.mxu0 %v131
    %147 = vmatpush.bf16.msra.mxu0 %v130
    %148 = vmatpush.bf16.msra.mxu0 %v129
    %149 = vmatpush.bf16.msra.mxu0 %v128
    %150 = vmatpush.bf16.msra.mxu0 %v127
    %151 = vmatmul.bf16.gmra.mxu0 %v94
    %v152 = vpop.f32.mrf.mxu0
    %v153 = vadd.f32 0.0, %v152
    %v154 = vpop.f32.mrf.mxu0
    %155 = vdwg.mxu0
    %v156 = vadd.f32 %v93, %v153
    %v157 = vtanh.pop %v156
    %158 = vset.pattern.permute.xlu0 2
    %159 = vperm.xlu0 %158, %v73
    %v160 = vpop.permute.xlu0 %159
    %v162 = vmul.f32 %v160, %v80
    %v163 = vadd.f32 %v162, %v84
    %v164 = vpack.c.bf16 %v157, %v157
    %165 = vmatpush.bf16.msra.mxu0 %v134
    %166 = vmatpush.bf16.msra.mxu0 %v133
    %167 = vmatpush.bf16.msra.mxu0 %v132
    %168 = vmatpush.bf16.msra.mxu0 %v131
    %169 = vmatpush.bf16.msra.mxu0 %v130
    %170 = vmatpush.bf16.msra.mxu0 %v129
    %171 = vmatpush.bf16.msra.mxu0 %v128
    %172 = vmatpush.bf16.msra.mxu0 %v127
    %173 = vmatmul.bf16.gmra.mxu0 %v164
    %v174 = vpop.f32.mrf.mxu0
    %v175 = vadd.f32 0.0, %v174
    %v176 = vpop.f32.mrf.mxu0
    %177 = vdwg.mxu0
    %v178 = vadd.f32 %v163, %v175
    %v179 = vtanh.pop %v178
    %180 = vset.pattern.permute.xlu0 3
    %181 = vperm.xlu0 %180, %v73
    %v182 = vpop.permute.xlu0 %181
    %v184 = vmul.f32 %v182, %v80
    %v185 = vadd.f32 %v184, %v84
    %v186 = vpack.c.bf16 %v179, %v179
    %187 = vmatpush.bf16.msra.mxu0 %v134
    %188 = vmatpush.bf16.msra.mxu0 %v133
    %189 = vmatpush.bf16.msra.mxu0 %v132
    %190 = vmatpush.bf16.msra.mxu0 %v131
    %191 = vmatpush.bf16.msra.mxu0 %v130
    %192 = vmatpush.bf16.msra.mxu0 %v129
    %193 = vmatpush.bf16.msra.mxu0 %v128
    %194 = vmatpush.bf16.msra.mxu0 %v127
    %195 = vmatmul.bf16.gmra.mxu0 %v186
    %v196 = vpop.f32.mrf.mxu0
    %v197 = vadd.f32 0.0, %v196
    %v198 = vpop.f32.mrf.mxu0
    %199 = vdwg.mxu0
    %v200 = vadd.f32 %v185, %v197
    %v201 = vtanh.pop %v200
    %202 = vset.pattern.permute.xlu0 4
    %203 = vperm.xlu0 %202, %v73
    %v204 = vpop.permute.xlu0 %203
    %v206 = vmul.f32 %v204, %v80
    %v207 = vadd.f32 %v206, %v84
    %v208 = vpack.c.bf16 %v201, %v201
    %209 = vmatpush.bf16.msra.mxu0 %v134
    %210 = vmatpush.bf16.msra.mxu0 %v133
    %211 = vmatpush.bf16.msra.mxu0 %v132
    %212 = vmatpush.bf16.msra.mxu0 %v131
    %213 = vmatpush.bf16.msra.mxu0 %v130
    %214 = vmatpush.bf16.msra.mxu0 %v129
    %215 = vmatpush.bf16.msra.mxu0 %v128
    %216 = vmatpush.bf16.msra.mxu0 %v127
    %217 = vmatmul.bf16.gmra.mxu0 %v208
    %v218 = vpop.f32.mrf.mxu0
    %v219 = vadd.f32 0.0, %v218
    %v220 = vpop.f32.mrf.mxu0
    %221 = vdwg.mxu0
    %v222 = vadd.f32 %v207, %v219
    %v223 = vtanh.pop %v222
    %224 = vset.pattern.permute.xlu0 5
    %225 = vperm.xlu0 %224, %v73
    %v226 = vpop.permute.xlu0 %225
    %v228 = vmul.f32 %v226, %v80
    %v229 = vadd.f32 %v228, %v84
    %v230 = vpack.c.bf16 %v223, %v223
    %231 = vmatpush.bf16.msra.mxu0 %v134
    %232 = vmatpush.bf16.msra.mxu0 %v133
    %233 = vmatpush.bf16.msra.mxu0 %v132
    %234 = vmatpush.bf16.msra.mxu0 %v131
    %235 = vmatpush.bf16.msra.mxu0 %v130
    %236 = vmatpush.bf16.msra.mxu0 %v129
    %237 = vmatpush.bf16.msra.mxu0 %v128
    %238 = vmatpush.bf16.msra.mxu0 %v127
    %239 = vmatmul.bf16.gmra.mxu0 %v230
    %v240 = vpop.f32.mrf.mxu0
    %v241 = vadd.f32 0.0, %v240
    %v242 = vpop.f32.mrf.mxu0
    %243 = vdwg.mxu0
    %v244 = vadd.f32 %v229, %v241
    %v245 = vtanh.pop %v244
    %246 = vset.pattern.permute.xlu0 6
    %247 = vperm.xlu0 %246, %v73
    %v248 = vpop.permute.xlu0 %247
    %v250 = vmul.f32 %v248, %v80
    %v251 = vadd.f32 %v250, %v84
    %v252 = vpack.c.bf16 %v245, %v245
    %253 = vmatpush.bf16.msra.mxu0 %v134
    %254 = vmatpush.bf16.msra.mxu0 %v133
    %255 = vmatpush.bf16.msra.mxu0 %v132
    %256 = vmatpush.bf16.msra.mxu0 %v131
    %257 = vmatpush.bf16.msra.mxu0 %v130
    %258 = vmatpush.bf16.msra.mxu0 %v129
    %259 = vmatpush.bf16.msra.mxu0 %v128
    %260 = vmatpush.bf16.msra.mxu0 %v127
    %261 = vmatmul.bf16.gmra.mxu0 %v252
    %v262 = vpop.f32.mrf.mxu0
    %v263 = vadd.f32 0.0, %v262
    %v264 = vpop.f32.mrf.mxu0
    %265 = vdwg.mxu0
    %v266 = vadd.f32 %v251, %v263
    %v267 = vtanh.pop %v266
    %268 = vset.pattern.permute.xlu0 7
    %269 = vperm.xlu0 %268, %v73
    %v270 = vpop.permute.xlu0 %269
    %v272 = vmul.f32 %v270, %v80
    %v273 = vadd.f32 %v272, %v84
    %v274 = vpack.c.bf16 %v267, %v267
    %275 = vmatpush.bf16.msra.mxu0 %v134
    %276 = vmatpush.bf16.msra.mxu0 %v133
    %277 = vmatpush.bf16.msra.mxu0 %v132
    %278 = vmatpush.bf16.msra.mxu0 %v131
    %279 = vmatpush.bf16.msra.mxu0 %v130
    %280 = vmatpush.bf16.msra.mxu0 %v129
    %281 = vmatpush.bf16.msra.mxu0 %v128
    %282 = vmatpush.bf16.msra.mxu0 %v127
    %283 = vmatmul.bf16.gmra.mxu0 %v274
    %v284 = vpop.f32.mrf.mxu0
    %v285 = vadd.f32 0.0, %v284
    %v286 = vpop.f32.mrf.mxu0
    %287 = vdwg.mxu0
    %v288 = vadd.f32 %v273, %v285
    %v289 = vtanh.pop %v288
    %290 = vset.pattern.permute.xlu0 8
    %291 = vperm.xlu0 %290, %v73
    %v292 = vpop.permute.xlu0 %291
    %v294 = vmul.f32 %v292, %v80
    %v295 = vadd.f32 %v294, %v84
    %v296 = vpack.c.bf16 %v289, %v289
    %297 = vmatpush.bf16.msra.mxu0 %v134
    %298 = vmatpush.bf16.msra.mxu0 %v133
    %299 = vmatpush.bf16.msra.mxu0 %v132
    %300 = vmatpush.bf16.msra.mxu0 %v131
    %301 = vmatpush.bf16.msra.mxu0 %v130
    %302 = vmatpush.bf16.msra.mxu0 %v129
    %303 = vmatpush.bf16.msra.mxu0 %v128
    %304 = vmatpush.bf16.msra.mxu0 %v127
    %305 = vmatmul.bf16.gmra.mxu0 %v296
    %v306 = vpop.f32.mrf.mxu0
    %v307 = vadd.f32 0.0, %v306
    %v308 = vpop.f32.mrf.mxu0
    %309 = vdwg.mxu0
    %v310 = vadd.f32 %v295, %v307
    %v311 = vtanh.pop %v310
    %312 = vset.pattern.permute.xlu0 9
    %313 = vperm.xlu0 %312, %v73
    %v314 = vpop.permute.xlu0 %313
    %v316 = vmul.f32 %v314, %v80
    %v317 = vadd.f32 %v316, %v84
    %v318 = vpack.c.bf16 %v311, %v311
    %319 = vmatpush.bf16.msra.mxu0 %v134
    %320 = vmatpush.bf16.msra.mxu0 %v133
    %321 = vmatpush.bf16.msra.mxu0 %v132
    %322 = vmatpush.bf16.msra.mxu0 %v131
    %323 = vmatpush.bf16.msra.mxu0 %v130
    %324 = vmatpush.bf16.msra.mxu0 %v129
    %325 = vmatpush.bf16.msra.mxu0 %v128
    %326 = vmatpush.bf16.msra.mxu0 %v127
    %327 = vmatmul.bf16.gmra.mxu0 %v318
    %v328 = vpop.f32.mrf.mxu0
    %v329 = vadd.f32 0.0, %v328
    %v330 = vpop.f32.mrf.mxu0
    %331 = vdwg.mxu0
    %v332 = vadd.f32 %v317, %v329
    %v333 = vtanh.pop %v332
    %334 = vset.pattern.permute.xlu0 10
    %335 = vperm.xlu0 %334, %v73
    %v336 = vpop.permute.xlu0 %335
    %v338 = vmul.f32 %v336, %v80
    %v339 = vadd.f32 %v338, %v84
    %v340 = vpack.c.bf16 %v333, %v333
    %341 = vmatpush.bf16.msra.mxu0 %v134
    %342 = vmatpush.bf16.msra.mxu0 %v133
    %343 = vmatpush.bf16.msra.mxu0 %v132
    %344 = vmatpush.bf16.msra.mxu0 %v131
    %345 = vmatpush.bf16.msra.mxu0 %v130
    %346 = vmatpush.bf16.msra.mxu0 %v129
    %347 = vmatpush.bf16.msra.mxu0 %v128
    %348 = vmatpush.bf16.msra.mxu0 %v127
    %349 = vmatmul.bf16.gmra.mxu0 %v340
    %v350 = vpop.f32.mrf.mxu0
    %v351 = vadd.f32 0.0, %v350
    %v352 = vpop.f32.mrf.mxu0
    %353 = vdwg.mxu0
    %v354 = vadd.f32 %v339, %v351
    %v355 = vtanh.pop %v354
    %356 = vset.pattern.permute.xlu0 11
    %357 = vperm.xlu0 %356, %v73
    %v358 = vpop.permute.xlu0 %357
    %v360 = vmul.f32 %v358, %v80
    %v361 = vadd.f32 %v360, %v84
    %v362 = vpack.c.bf16 %v355, %v355
    %363 = vmatpush.bf16.msra.mxu0 %v134
    %364 = vmatpush.bf16.msra.mxu0 %v133
    %365 = vmatpush.bf16.msra.mxu0 %v132
    %366 = vmatpush.bf16.msra.mxu0 %v131
    %367 = vmatpush.bf16.msra.mxu0 %v130
    %368 = vmatpush.bf16.msra.mxu0 %v129
    %369 = vmatpush.bf16.msra.mxu0 %v128
    %370 = vmatpush.bf16.msra.mxu0 %v127
    %371 = vmatmul.bf16.gmra.mxu0 %v362
    %v372 = vpop.f32.mrf.mxu0
    %v373 = vadd.f32 0.0, %v372
    %v374 = vpop.f32.mrf.mxu0
    %375 = vdwg.mxu0
    %v376 = vadd.f32 %v361, %v373
    %v377 = vtanh.pop %v376
    %378 = vset.pattern.permute.xlu0 12
    %379 = vperm.xlu0 %378, %v73
    %v380 = vpop.permute.xlu0 %379
    %v382 = vmul.f32 %v380, %v80
    %v383 = vadd.f32 %v382, %v84
    %v384 = vpack.c.bf16 %v377, %v377
    %385 = vmatpush.bf16.msra.mxu0 %v134
    %386 = vmatpush.bf16.msra.mxu0 %v133
    %387 = vmatpush.bf16.msra.mxu0 %v132
    %388 = vmatpush.bf16.msra.mxu0 %v131
    %389 = vmatpush.bf16.msra.mxu0 %v130
    %390 = vmatpush.bf16.msra.mxu0 %v129
    %391 = vmatpush.bf16.msra.mxu0 %v128
    %392 = vmatpush.bf16.msra.mxu0 %v127
    %393 = vmatmul.bf16.gmra.mxu0 %v384
    %v394 = vpop.f32.mrf.mxu0
    %v395 = vadd.f32 0.0, %v394
    %v396 = vpop.f32.mrf.mxu0
    %397 = vdwg.mxu0
    %v398 = vadd.f32 %v383, %v395
    %v399 = vtanh.pop %v398
    %400 = vset.pattern.permute.xlu0 13
    %401 = vperm.xlu0 %400, %v73
    %v402 = vpop.permute.xlu0 %401
    %v404 = vmul.f32 %v402, %v80
    %v405 = vadd.f32 %v404, %v84
    %v406 = vpack.c.bf16 %v399, %v399
    %407 = vmatpush.bf16.msra.mxu0 %v134
    %408 = vmatpush.bf16.msra.mxu0 %v133
    %409 = vmatpush.bf16.msra.mxu0 %v132
    %410 = vmatpush.bf16.msra.mxu0 %v131
    %411 = vmatpush.bf16.msra.mxu0 %v130
    %412 = vmatpush.bf16.msra.mxu0 %v129
    %413 = vmatpush.bf16.msra.mxu0 %v128
    %414 = vmatpush.bf16.msra.mxu0 %v127
    %415 = vmatmul.bf16.gmra.mxu0 %v406
    %v416 = vpop.f32.mrf.mxu0
    %v417 = vadd.f32 0.0, %v416
    %v418 = vpop.f32.mrf.mxu0
    %419 = vdwg.mxu0
    %v420 = vadd.f32 %v405, %v417
    %v421 = vtanh.pop %v420
    %422 = vset.pattern.permute.xlu0 14
    %423 = vperm.xlu0 %422, %v73
    %v424 = vpop.permute.xlu0 %423
    %v426 = vmul.f32 %v424, %v80
    %v427 = vadd.f32 %v426, %v84
    %v428 = vpack.c.bf16 %v421, %v421
    %429 = vmatpush.bf16.msra.mxu0 %v134
    %430 = vmatpush.bf16.msra.mxu0 %v133
    %431 = vmatpush.bf16.msra.mxu0 %v132
    %432 = vmatpush.bf16.msra.mxu0 %v131
    %433 = vmatpush.bf16.msra.mxu0 %v130
    %434 = vmatpush.bf16.msra.mxu0 %v129
    %435 = vmatpush.bf16.msra.mxu0 %v128
    %436 = vmatpush.bf16.msra.mxu0 %v127
    %437 = vmatmul.bf16.gmra.mxu0 %v428
    %v438 = vpop.f32.mrf.mxu0
    %v439 = vadd.f32 0.0, %v438
    %v440 = vpop.f32.mrf.mxu0
    %441 = vdwg.mxu0
    %v442 = vadd.f32 %v427, %v439
    %v443 = vtanh.pop %v442
    %444 = vset.pattern.permute.xlu0 15
    %445 = vperm.xlu0 %444, %v73
    %v446 = vpop.permute.xlu0 %445
    %v448 = vmul.f32 %v446, %v80
    %v449 = vadd.f32 %v448, %v84
    %v450 = vpack.c.bf16 %v443, %v443
    %451 = vmatpush.bf16.msra.mxu0 %v134
    %452 = vmatpush.bf16.msra.mxu0 %v133
    %453 = vmatpush.bf16.msra.mxu0 %v132
    %454 = vmatpush.bf16.msra.mxu0 %v131
    %455 = vmatpush.bf16.msra.mxu0 %v130
    %456 = vmatpush.bf16.msra.mxu0 %v129
    %457 = vmatpush.bf16.msra.mxu0 %v128
    %458 = vmatpush.bf16.msra.mxu0 %v127
    %459 = vmatmul.bf16.gmra.mxu0 %v450
    %v460 = vpop.f32.mrf.mxu0
    %v461 = vadd.f32 0.0, %v460
    %v462 = vpop.f32.mrf.mxu0
    %463 = vdwg.mxu0
    %v464 = vadd.f32 %v449, %v461
    %v465 = vtanh.pop %v464
    %466 = vset.pattern.permute.xlu0 16
    %467 = vperm.xlu0 %466, %v73
    %v468 = vpop.permute.xlu0 %467
    %v470 = vmul.f32 %v468, %v80
    %v471 = vadd.f32 %v470, %v84
    %v472 = vpack.c.bf16 %v465, %v465
    %473 = vmatpush.bf16.msra.mxu0 %v134
    %474 = vmatpush.bf16.msra.mxu0 %v133
    %475 = vmatpush.bf16.msra.mxu0 %v132
    %476 = vmatpush.bf16.msra.mxu0 %v131
    %477 = vmatpush.bf16.msra.mxu0 %v130
    %478 = vmatpush.bf16.msra.mxu0 %v129
    %479 = vmatpush.bf16.msra.mxu0 %v128
    %480 = vmatpush.bf16.msra.mxu0 %v127
    %481 = vmatmul.bf16.gmra.mxu0 %v472
    %v482 = vpop.f32.mrf.mxu0
    %v483 = vadd.f32 0.0, %v482
    %v484 = vpop.f32.mrf.mxu0
    %485 = vdwg.mxu0
    %v486 = vadd.f32 %v471, %v483
    %v487 = vtanh.pop %v486
    %488 = vset.pattern.permute.xlu0 17
    %489 = vperm.xlu0 %488, %v73
    %v490 = vpop.permute.xlu0 %489
    %v492 = vmul.f32 %v490, %v80
    %v493 = vadd.f32 %v492, %v84
    %v494 = vpack.c.bf16 %v487, %v487
    %495 = vmatpush.bf16.msra.mxu0 %v134
    %496 = vmatpush.bf16.msra.mxu0 %v133
    %497 = vmatpush.bf16.msra.mxu0 %v132
    %498 = vmatpush.bf16.msra.mxu0 %v131
    %499 = vmatpush.bf16.msra.mxu0 %v130
    %500 = vmatpush.bf16.msra.mxu0 %v129
    %501 = vmatpush.bf16.msra.mxu0 %v128
    %502 = vmatpush.bf16.msra.mxu0 %v127
    %503 = vmatmul.bf16.gmra.mxu0 %v494
    %v504 = vpop.f32.mrf.mxu0
    %v505 = vadd.f32 0.0, %v504
    %v506 = vpop.f32.mrf.mxu0
    %507 = vdwg.mxu0
    %v508 = vadd.f32 %v493, %v505
    %v509 = vtanh.pop %v508
    %510 = vset.pattern.permute.xlu0 18
    %511 = vperm.xlu0 %510, %v73
    %v512 = vpop.permute.xlu0 %511
    %v514 = vmul.f32 %v512, %v80
    %v515 = vadd.f32 %v514, %v84
    %v516 = vpack.c.bf16 %v509, %v509
    %517 = vmatpush.bf16.msra.mxu0 %v134
    %518 = vmatpush.bf16.msra.mxu0 %v133
    %519 = vmatpush.bf16.msra.mxu0 %v132
    %520 = vmatpush.bf16.msra.mxu0 %v131
    %521 = vmatpush.bf16.msra.mxu0 %v130
    %522 = vmatpush.bf16.msra.mxu0 %v129
    %523 = vmatpush.bf16.msra.mxu0 %v128
    %524 = vmatpush.bf16.msra.mxu0 %v127
    %525 = vmatmul.bf16.gmra.mxu0 %v516
    %v526 = vpop.f32.mrf.mxu0
    %v527 = vadd.f32 0.0, %v526
    %v528 = vpop.f32.mrf.mxu0
    %529 = vdwg.mxu0
    %v530 = vadd.f32 %v515, %v527
    %v531 = vtanh.pop %v530
    %532 = vset.pattern.permute.xlu0 19
    %533 = vperm.xlu0 %532, %v73
    %v534 = vpop.permute.xlu0 %533
    %v536 = vmul.f32 %v534, %v80
    %v537 = vadd.f32 %v536, %v84
    %v538 = vpack.c.bf16 %v531, %v531
    %539 = vmatpush.bf16.msra.mxu0 %v134
    %540 = vmatpush.bf16.msra.mxu0 %v133
    %541 = vmatpush.bf16.msra.mxu0 %v132
    %542 = vmatpush.bf16.msra.mxu0 %v131
    %543 = vmatpush.bf16.msra.mxu0 %v130
    %544 = vmatpush.bf16.msra.mxu0 %v129
    %545 = vmatpush.bf16.msra.mxu0 %v128
    %546 = vmatpush.bf16.msra.mxu0 %v127
    %547 = vmatmul.bf16.gmra.mxu0 %v538
    %v548 = vpop.f32.mrf.mxu0
    %v549 = vadd.f32 0.0, %v548
    %v550 = vpop.f32.mrf.mxu0
    %551 = vdwg.mxu0
    %v552 = vadd.f32 %v537, %v549
    %v553 = vtanh.pop %v552
    %v554 = vld [vmem:[%s4] sm:$0x1]
    %v556 = vperm.slane %v554, 0
    %v558 = vmul.f32 %v553, %v556
    %559 = vadd.xlane.f32.xlu0 %v558
    %v560 = vpop.xlane.xlu0 %559
    %v561 = vld [vmem:[#allocation2] sm:$0x1]
    %v563 = vperm.slane %v561, 0
    %v565 = vadd.f32 %v560, %v563
    %vm566 = vcmask 7168
    %567 = vst.msk [vmem:[%s6] sm:$0xff] %vm566, %v565
    // Predicated region
    $region34: #{_forward.1} parent=1 // pred_check
      _
    $region35: #{_forward.1} parent=1 // pred_check_branch
      %569 = sbr.rel (0) target = $region37
    $region36: #{_forward.1} parent=1 // pred_region
      _
    $region37: #{_forward.1} parent=1 // pred_fallthru
      _
    // Predicated region
    $region38: #{_forward.1} parent=1 // pred_check
      _
    $region39: #{_forward.1} parent=1 // pred_check_branch
      %571 = sbr.rel (0) target = $region41
    $region40: #{_forward.1} parent=1 // pred_region
      _
    $region41: #{_forward.1} parent=1 // pred_fallthru
      _
    %572 = vsyncpa [#allocation4], 1
    %573 = vsyncpa [#allocation6], 1

</llo_original>
